<compile_context>
chip_gen: v7x
topology: tpu7x:2x2x1
jax: 0.10.0
libtpu: 0.0.40
codegen_flags: <defaults>
</compile_context>

<pallas_src>
import math

import jax
import jax.numpy as jnp
from jax import lax
from jax.experimental import pallas as pl
from jax.experimental.pallas import tpu as pltpu


_VMEM_LIMIT = 64 * 1024 * 1024         # above the 16/32 MiB scoped defaults
_ATTN_VMEM_BUDGET = 40 * 1024 * 1024   # headroom under v7x's 64 MiB physical VMEM


def _pick_sublane_tile(n, preferred):
    """Tile for a second-minor (sublane) dim: multiple of 8 dividing n, else full."""
    if n <= preferred:
        return n
    for t in range(preferred, 7, -1):
        if n % t == 0 and t % 8 == 0:
            return t
    return n   # full extent is always layout-legal


def _pick_lane_tile(n, preferred):
    """Tile for a minor (lane) dim: multiple of 128 dividing n, else full."""
    if n <= preferred:
        return n
    start = preferred - preferred % 128
    for t in range(start, 127, -128):
        if n % t == 0:
            return t
    return n


# ---------------------------------------------------------------------------
# Fused linear: y = x @ W_t + b, tiled over (M, N, K) with f32 accumulation.
# x and W_t are bf16 (cast once on the host); bias stays f32.
# ---------------------------------------------------------------------------
def _linear_kernel(x_ref, w_ref, b_ref, o_ref, acc_ref):
    @pl.when(pl.program_id(2) == 0)
    def _init():
        acc_ref[...] = jnp.zeros_like(acc_ref)

    acc_ref[...] += jnp.dot(x_ref[...], w_ref[...],
                            preferred_element_type=jnp.float32)

    @pl.when(pl.program_id(2) == pl.num_programs(2) - 1)
    def _finalize():
        o_ref[...] = (acc_ref[...] + b_ref[...]).astype(o_ref.dtype)


def _linear(x, w_t, b, *, out_dtype, tm=512, tn=512, tk=1024):
    M, h_in = x.shape
    h_out = w_t.shape[1]
    tm = _pick_sublane_tile(M, tm)
    tn = _pick_lane_tile(h_out, tn)
    tk = _pick_lane_tile(h_in, tk)
    return pl.pallas_call(
        _linear_kernel,
        out_shape=jax.ShapeDtypeStruct((M, h_out), out_dtype),
        grid_spec=pltpu.PrefetchScalarGridSpec(
            num_scalar_prefetch=0,
            grid=(M // tm, h_out // tn, h_in // tk),
            in_specs=[
                pl.BlockSpec((tm, tk), lambda i, j, k: (i, k)),
                pl.BlockSpec((tk, tn), lambda i, j, k: (k, j)),
                pl.BlockSpec((1, tn), lambda i, j, k: (0, j)),
            ],
            out_specs=pl.BlockSpec((tm, tn), lambda i, j, k: (i, j)),
            scratch_shapes=[pltpu.VMEM((tm, tn), jnp.float32)],
        ),
        compiler_params=pltpu.CompilerParams(
            dimension_semantics=("parallel", "parallel", "arbitrary"),
            vmem_limit_bytes=_VMEM_LIMIT),
    )(x, w_t, b)


# ---------------------------------------------------------------------------
# Flash-style multi-head attention with the output projection fused into the
# finalize. Q is pre-scaled (1/sqrt(hid_dim) folded into Wq).
# ---------------------------------------------------------------------------
def _flash_attention_kernel(q_ref, k_ref, v_ref, wo_ref, bo_ref, o_ref,
                            m_sc, l_sc, acc_sc):
    n_heads = acc_sc.shape[0]
    ki = pl.program_id(2)

    @pl.when(ki == 0)
    def _init():
        m_sc[...] = jnp.full(m_sc.shape, -jnp.inf, jnp.float32)
        l_sc[...] = jnp.zeros(l_sc.shape, jnp.float32)
        acc_sc[...] = jnp.zeros(acc_sc.shape, jnp.float32)

    q = q_ref[0]        # (n_heads, TQ, d) bf16, scale already folded into Wq
    k = k_ref[0]        # (n_heads, TK, d) bf16
    v = v_ref[0]        # (n_heads, TK, d) bf16

    # scores (n_heads, TQ, TK): batch over heads, contract over d (no K.T).
    s = lax.dot_general(q, k,
                        dimension_numbers=(((2,), (2,)), ((0,), (0,))),
                        preferred_element_type=jnp.float32)

    # Online softmax — f32 state on the VPU/EUP (v5e has no bf16 VPU/EUP).
    # TODO(synk): bf16 exp on v6e/v7x only (chip-gated) could halve EUP work.
    m_prev = m_sc[...]
    m_new = jnp.maximum(m_prev, jnp.max(s, axis=-1, keepdims=True))
    alpha = jnp.exp(m_prev - m_new)
    p = jnp.exp(s - m_new)
    l_sc[...] = alpha * l_sc[...] + jnp.sum(p, axis=-1, keepdims=True)
    pv = lax.dot_general(p.astype(jnp.bfloat16), v,
                         dimension_numbers=(((2,), (1,)), ((0,), (0,))),
                         preferred_element_type=jnp.float32)   # (n_heads, TQ, d)
    acc_sc[...] = alpha * acc_sc[...] + pv
    m_sc[...] = m_new

    # Dropout on the attention weights is identity in eval mode.

    @pl.when(ki == pl.num_programs(2) - 1)
    def _finalize():
        inv_l = pl.reciprocal(l_sc[...], approx=True)            # EUP slot
        out_h = (acc_sc[...] * inv_l).astype(jnp.bfloat16)       # (n_heads, TQ, d)
        # Fused output projection: y[q, o] = sum_h out_h[h] @ Wo[h].
        # Per-head 2-D MXU matmuls accumulated in f32, then one lane-dense
        # (TQ, H) store — no per-head lane-narrow stores, no O HBM round trip.
        y = jnp.dot(out_h[0], wo_ref[0], preferred_element_type=jnp.float32)
        for h in range(1, n_heads):
            y += jnp.dot(out_h[h], wo_ref[h], preferred_element_type=jnp.float32)
        o_ref[0] = (y + bo_ref[...]).astype(o_ref.dtype)


def _attn_tiles(S, n_heads, d, H, tq_pref, tk_pref):
    """Pick hardware-legal q/kv tiles that fit an explicit VMEM budget."""
    def est(tq, tk):
        bf16, f32 = 2, 4
        qb = 2 * n_heads * tq * d * bf16             # double-buffered Q block
        kvb = 2 * 2 * n_heads * tk * d * bf16        # double-buffered K + V blocks
        ob = 2 * tq * H * f32                        # double-buffered out block
        wob = n_heads * d * H * bf16 + H * f32       # resident Wo + bias
        sc = n_heads * tq * (d + 2) * f32            # m / l / acc scratch
        live = 2 * n_heads * tq * tk * f32           # s and p intermediates
        epi = tq * H * f32                           # fused-projection accumulator
        return qb + kvb + ob + wob + sc + live + epi

    tq_p, tk_p = tq_pref, tk_pref
    while True:
        tq = _pick_sublane_tile(S, tq_p)
        tk = _pick_sublane_tile(S, tk_p)
        if est(tq, tk) <= _ATTN_VMEM_BUDGET or (tq_p <= 128 and tk_p <= 128):
            return tq, tk
        if tq_p >= tk_p:
            tq_p = max(128, tq_p // 2)
        else:
            tk_p = max(128, tk_p // 2)


def _flash_attention(qh, kh, vh, wo_h, bo, *, out_dtype, tq=512, tk=512):
    B, n_heads, S, d = qh.shape
    H = n_heads * d
    tq, tk = _attn_tiles(S, n_heads, d, H, tq, tk)

    q_spec = pl.BlockSpec((1, n_heads, tq, d), lambda b, qi, ki: (b, 0, qi, 0))
    kv_spec = pl.BlockSpec((1, n_heads, tk, d), lambda b, qi, ki: (b, 0, ki, 0))
    wo_spec = pl.BlockSpec((n_heads, d, H), lambda b, qi, ki: (0, 0, 0))
    bo_spec = pl.BlockSpec((1, H), lambda b, qi, ki: (0, 0))
    out_spec = pl.BlockSpec((1, tq, H), lambda b, qi, ki: (b, qi, 0))

    # Note: parallel grid = (B, S // tq); keep it >= 2 for v7x's two TCs.
    return pl.pallas_call(
        _flash_attention_kernel,
        out_shape=jax.ShapeDtypeStruct((B, S, H), out_dtype),
        grid_spec=pltpu.PrefetchScalarGridSpec(
            num_scalar_prefetch=0,
            grid=(B, S // tq, S // tk),
            in_specs=[q_spec, kv_spec, kv_spec, wo_spec, bo_spec],
            out_specs=out_spec,
            scratch_shapes=[
                pltpu.VMEM((n_heads, tq, 1), jnp.float32),   # running max
                pltpu.VMEM((n_heads, tq, 1), jnp.float32),   # running denom
                pltpu.VMEM((n_heads, tq, d), jnp.float32),   # output accumulator
            ],
        ),
        compiler_params=pltpu.CompilerParams(
            dimension_semantics=("parallel", "parallel", "arbitrary"),
            vmem_limit_bytes=_VMEM_LIMIT),
    )(qh, kh, vh, wo_h, bo)


# ---------------------------------------------------------------------------
# Full SelfAttention forward
# ---------------------------------------------------------------------------
def self_attention(query, key, value, params, *, n_heads,
                   tq=512, tk=512, tm=512):
    """query/key/value: (B, S, H). params: dict of transposed weights/biases."""
    B, S, H = query.shape
    assert H % n_heads == 0
    d = H // n_heads
    inv_scale = 1.0 / math.sqrt(float(H))     # module divides by sqrt(hid_dim)

    # Fold the softmax scale into the Q projection; cast weights to bf16 once.
    wq = (params["wq_t"] * inv_scale).astype(jnp.bfloat16)
    bq = params["bq"] * inv_scale
    wk = params["wk_t"].astype(jnp.bfloat16)
    wv = params["wv_t"].astype(jnp.bfloat16)
    bk, bv = params["bk"], params["bv"]
    # Wo reshaped head-major for the fused in-kernel projection: Wo[h, dd, o].
    wo_h = params["wo_t"].astype(jnp.bfloat16).reshape(n_heads, d, H)
    bo = params["bo"]

    # bf16 activations on the host: halves x DMA bytes into every projection.
    q2 = query.reshape(B * S, H).astype(jnp.bfloat16)
    k2 = key.reshape(B * S, H).astype(jnp.bfloat16)
    v2 = value.reshape(B * S, H).astype(jnp.bfloat16)

    Q = _linear(q2, wq, bq, out_dtype=jnp.bfloat16, tm=tm).reshape(B, S, n_heads, d)
    K = _linear(k2, wk, bk, out_dtype=jnp.bfloat16, tm=tm).reshape(B, S, n_heads, d)
    V = _linear(v2, wv, bv, out_dtype=jnp.bfloat16, tm=tm).reshape(B, S, n_heads, d)

    # TODO(synk): head-major transpose is still an XLA-level bf16 copy of
    # Q/K/V; emitting head-major directly from the projections trades it for
    # lane-narrow stores / weight re-reads, so it is kept here.
    Qh = Q.transpose(0, 2, 1, 3)
    Kh = K.transpose(0, 2, 1, 3)
    Vh = V.transpose(0, 2, 1, 3)

    # Attention + fused output projection (no separate 4th linear kernel).
    out = _flash_attention(Qh, Kh, Vh, wo_h, bo,
                           out_dtype=query.dtype, tq=tq, tk=tk)
    return out


def init_params(key, hid_dim):
    """Deterministic init matching nn.Linear(hid_dim, hid_dim) shapes.

    PyTorch stores W as (out, in); we store the transpose (in, out) so the
    kernel computes x @ W_t + b. Biases are kept 2-D (1, H) for VMEM layout."""
    keys = jax.random.split(key, 8)
    bound = 1.0 / math.sqrt(hid_dim)

    def lin(kw, kb):
        w = jax.random.uniform(kw, (hid_dim, hid_dim), jnp.float32, -bound, bound)
        b = jax.random.uniform(kb, (1, hid_dim), jnp.float32, -bound, bound)
        return w.T, b  # transposed weight

    wq_t, bq = lin(keys[0], keys[1])
    wk_t, bk = lin(keys[2], keys[3])
    wv_t, bv = lin(keys[4], keys[5])
    wo_t, bo = lin(keys[6], keys[7])
    return dict(wq_t=wq_t, bq=bq, wk_t=wk_t, bk=bk,
                wv_t=wv_t, bv=bv, wo_t=wo_t, bo=bo)


def reference_self_attention(query, key, value, params, *, n_heads):
    """Pure-JAX fp32 reference mirroring the PyTorch forward (mask=None, eval)."""
    B, S, H = query.shape
    d = H // n_heads
    scale = math.sqrt(float(H))

    def proj(x, w_t, b):
        return x @ w_t + b[0]

    Q = proj(query, params["wq_t"], params["bq"])
    K = proj(key, params["wk_t"], params["bk"])
    V = proj(value, params["wv_t"], params["bv"])

    Q = Q.reshape(B, S, n_heads, d).transpose(0, 2, 1, 3)
    K = K.reshape(B, S, n_heads, d).transpose(0, 2, 1, 3)
    V = V.reshape(B, S, n_heads, d).transpose(0, 2, 1, 3)

    energy = jnp.einsum("bhqd,bhkd->bhqk", Q, K) / scale
    attn = jax.nn.softmax(energy, axis=-1)
    X = jnp.einsum("bhqk,bhkd->bhqd", attn, V)
    X = X.transpose(0, 2, 1, 3).reshape(B, S, H)
    return proj(X, params["wo_t"], params["bo"])


if __name__ == "__main__":
    B, S, H = 2, 8, 32
    N_HEADS = 4

    key = jax.random.PRNGKey(0)
    k_q, k_k, k_v, k_p = jax.random.split(key, 4)
    query = jax.random.normal(k_q, (B, S, H), jnp.float32)
    key_in = jax.random.normal(k_k, (B, S, H), jnp.float32)
    value = jax.random.normal(k_v, (B, S, H), jnp.float32)
    params = init_params(k_p, H)

    out = self_attention(query, key_in, value, params, n_heads=N_HEADS)
    out = jax.block_until_ready(out)

    ref = reference_self_attention(query, key_in, value, params, n_heads=N_HEADS)
    assert out.shape == (B, S, H)
    assert bool(jnp.isfinite(out).all()), "non-finite output"
    # Kernel runs bf16 MXU matmuls (f32 accumulation) vs a pure-f32 reference,
    # so allow a bf16-scale tolerance.
    max_err = float(jnp.max(jnp.abs(out - ref)))
    assert max_err < 1e-1, f"max abs err {max_err}"

    print("KERNEL_OK")
</pallas_src>

<mosaic_0001>
module attributes {stable_mosaic.version = 11 : i64} {
  func.func @_linear_kernel(%arg0: i32, %arg1: i32, %arg2: i32, %arg3: memref<16x32xbf16, #tpu.memory_space<vmem>>, %arg4: memref<32x32xbf16, #tpu.memory_space<vmem>>, %arg5: memref<1x32xf32, #tpu.memory_space<vmem>>, %arg6: memref<16x32xbf16, #tpu.memory_space<vmem>>, %arg7: memref<16x32xf32, #tpu.memory_space<vmem>>) attributes {dimension_semantics = [#tpu.dimension_semantics<parallel>, #tpu.dimension_semantics<parallel>, #tpu.dimension_semantics<arbitrary>], iteration_bounds = array<i64: 1, 1, 1>, scalar_prefetch = 0 : i64, scratch_operands = 1 : i64, tpu.core_type = #tpu.core_type<tc>, window_params = [{transform_indices = @transform_0, window_bounds = array<i64: 16, 32>}, {transform_indices = @transform_1, window_bounds = array<i64: 32, 32>}, {transform_indices = @transform_2, window_bounds = array<i64: 1, 32>}, {transform_indices = @transform_3, window_bounds = array<i64: 16, 32>}]} {
    %c0_i32 = arith.constant 0 : i32
    %0 = arith.cmpi eq, %arg2, %c0_i32 : i32
    %1 = arith.extui %0 : i1 to i32
    %c0_i32_0 = arith.constant 0 : i32
    %2 = arith.cmpi ne, %1, %c0_i32_0 : i32
    scf.if %2 {
      %cst_10 = arith.constant 0.000000e+00 : f32
      %12 = vector.broadcast %cst_10 : f32 to vector<16x32xf32>
      %c0_11 = arith.constant 0 : index
      %c0_12 = arith.constant 0 : index
      %13 = vector.load %arg7[%c0_11, %c0_12] : memref<16x32xf32, #tpu.memory_space<vmem>>, vector<16x32xf32>
      tpu.vector_store %arg7[%c0_11, %c0_12], %12 {strides = array<i32>} : memref<16x32xf32, #tpu.memory_space<vmem>>, vector<16x32xf32>,
    } else {
    }
    %c0 = arith.constant 0 : index
    %c0_1 = arith.constant 0 : index
    %3 = vector.load %arg7[%c0, %c0_1] : memref<16x32xf32, #tpu.memory_space<vmem>>, vector<16x32xf32>
    %c0_2 = arith.constant 0 : index
    %c0_3 = arith.constant 0 : index
    %4 = vector.load %arg3[%c0_2, %c0_3] : memref<16x32xbf16, #tpu.memory_space<vmem>>, vector<16x32xbf16>
    %c0_4 = arith.constant 0 : index
    %c0_5 = arith.constant 0 : index
    %5 = vector.load %arg4[%c0_4, %c0_5] : memref<32x32xbf16, #tpu.memory_space<vmem>>, vector<32x32xbf16>
    %cst = arith.constant dense<0.000000e+00> : vector<16x32xf32>
    %6 = tpu.matmul %4, %5, %cst {dimension_numbers = #tpu.dot_dimension_numbers<[1], [0], [0], [1], [0, 0, 1, 1], [], []>} : vector<16x32xbf16>, vector<32x32xbf16>, vector<16x32xf32> -> vector<16x32xf32>
    %7 = arith.addf %3, %6 : vector<16x32xf32>
    %c0_6 = arith.constant 0 : index
    %c0_7 = arith.constant 0 : index
    %8 = vector.load %arg7[%c0_6, %c0_7] : memref<16x32xf32, #tpu.memory_space<vmem>>, vector<16x32xf32>
    tpu.vector_store %arg7[%c0_6, %c0_7], %7 {strides = array<i32>} : memref<16x32xf32, #tpu.memory_space<vmem>>, vector<16x32xf32>,
    %c0_i32_8 = arith.constant 0 : i32
    %9 = arith.cmpi eq, %arg2, %c0_i32_8 : i32
    %10 = arith.extui %9 : i1 to i32
    %c0_i32_9 = arith.constant 0 : i32
    %11 = arith.cmpi ne, %10, %c0_i32_9 : i32
    scf.if %11 {
      %c0_10 = arith.constant 0 : index
      %c0_11 = arith.constant 0 : index
      %12 = vector.load %arg7[%c0_10, %c0_11] : memref<16x32xf32, #tpu.memory_space<vmem>>, vector<16x32xf32>
      %c0_12 = arith.constant 0 : index
      %c0_13 = arith.constant 0 : index
      %13 = vector.load %arg5[%c0_12, %c0_13] : memref<1x32xf32, #tpu.memory_space<vmem>>, vector<1x32xf32>
      %14 = vector.broadcast %13 : vector<1x32xf32> to vector<16x32xf32>
      %15 = arith.addf %12, %14 : vector<16x32xf32>
      %16 = arith.truncf %15 : vector<16x32xf32> to vector<16x32xbf16>
      %c0_14 = arith.constant 0 : index
      %c0_15 = arith.constant 0 : index
      %17 = vector.load %arg6[%c0_14, %c0_15] : memref<16x32xbf16, #tpu.memory_space<vmem>>, vector<16x32xbf16>
      tpu.vector_store %arg6[%c0_14, %c0_15], %16 {strides = array<i32>} : memref<16x32xbf16, #tpu.memory_space<vmem>>, vector<16x32xbf16>,
    } else {
    }
    return
  }
  func.func @transform_0(%arg0: i32, %arg1: i32, %arg2: i32) -> (i32, i32) {
    %c0_i32 = arith.constant 0 : i32
    return %arg0, %arg2 : i32, i32
  }
  func.func @transform_1(%arg0: i32, %arg1: i32, %arg2: i32) -> (i32, i32) {
    %c0_i32 = arith.constant 0 : i32
    return %arg2, %arg1 : i32, i32
  }
  func.func @transform_2(%arg0: i32, %arg1: i32, %arg2: i32) -> (i32, i32) {
    %c0_i32 = arith.constant 0 : i32
    %c0_i32_0 = arith.constant 0 : i32
    return %c0_i32, %arg1 : i32, i32
  }
  func.func @transform_3(%arg0: i32, %arg1: i32, %arg2: i32) -> (i32, i32) {
    %c0_i32 = arith.constant 0 : i32
    return %arg0, %arg1 : i32, i32
  }
}

</mosaic_0001>

<llo_original>
// kernel: tpu_custom_call.1
$region0: #{tpu_custom_call.1}
  #allocation0 [shape = 'u32[]', space=smem, size = 0x4, offset = 0x4, fixed_abs, tag = 'smem constant byte address 0x4 - core index']
  #allocation1 [shape = 'u32[144,128]{1,0:T(1,128)}', space=vmem, size = 0x12000, scoped, tag = 'internal scratch']
  #allocation2 [shape = 'f32[16,32]{1,0:T(8,128)}', space=vmem, size = 0x2000, scoped, tag = 'scratch operand']
  %s0 = inlined_call_operand.hbm [shape: bf16[16,32], index: 0, kind: input, shape index: {}]
  %s1 = inlined_call_operand.hbm [shape: bf16[32,32], index: 1, kind: input, shape index: {}]
  %s2 = inlined_call_operand.hbm [shape: f32[1,32], index: 2, kind: input, shape index: {}]
  %s3 = inlined_call_operand.hbm [shape: bf16[16,32], index: 3, kind: output, shape index: {}]
  %s4 = sld [smem:[#allocation0]]
  $region42: #{tpu_custom_call.1} parent=0
    _
  %s6 = ssub.s32 1, %s4
  %s7 = scalar_select 0, %s6, %s4
  $region1: #{tpu_custom_call.1} parent=0
    #allocation3 [shape = 'u8[4096]{0}', space=vmem, size = 0x1000, scoped, tag = 'input window, operand 0, single buffered']
    #allocation4 [shape = 's32[1]{0}', space=sflag, size = 0x4, scoped, tag = 'scoped memory for tpu_custom_call.1']
    #allocation5 [shape = 's32[1]{0}', space=sflag, size = 0x4, scoped, tag = 'scoped memory for tpu_custom_call.1']
    #allocation6 [shape = 'u8[8192]{0}', space=vmem, size = 0x2000, scoped, tag = 'input window, operand 1, single buffered']
    #allocation7 [shape = 's32[1]{0}', space=sflag, size = 0x4, scoped, tag = 'scoped memory for tpu_custom_call.1']
    #allocation8 [shape = 'u8[512]{0}', space=vmem, size = 0x400, scoped, tag = 'input window, operand 2, single buffered']
    #allocation9 [shape = 'u8[4096]{0}', space=vmem, size = 0x1000, scoped, tag = 'output window, operand 0, single buffered']
    %8 = vsyncpa [#allocation4], 0
    %9 = vsyncpa [#allocation7], 0
    %10 = vsyncpa [#allocation5], 0
    // Predicated region
    $region2: #{tpu_custom_call.1} parent=1 // pred_check
      _
    $region3: #{tpu_custom_call.1} parent=1 // pred_check_branch
      %12 = sbr.rel (0) target = $region5
    $region4: #{tpu_custom_call.1} parent=1 // pred_region
      %s14 = ssub.s32 128, 128
      %15 = vsyncadd [#allocation4], %s14
      %s16 = sshll.u32 [#allocation3], 4
      %s17 = int_to_ptr.vmem [resolvable:$true] %s16
      %22 = dma.hbm_to_vmem [thread:$0]  %s0, 128, %s17, [#allocation4], 64, 64, 4
    $region5: #{tpu_custom_call.1} parent=1 // pred_fallthru
      _
    // Predicated region
    $region6: #{tpu_custom_call.1} parent=1 // pred_check
      _
    $region7: #{tpu_custom_call.1} parent=1 // pred_check_branch
      %24 = sbr.rel (0) target = $region9
    $region8: #{tpu_custom_call.1} parent=1 // pred_region
      %s26 = ssub.s32 256, 256
      %27 = vsyncadd [#allocation7], %s26
      %s28 = sshll.u32 [#allocation6], 4
      %s29 = int_to_ptr.vmem [resolvable:$true] %s28
      %34 = dma.hbm_to_vmem [thread:$0]  %s1, 256, %s29, [#allocation7], 64, 64, 4
    $region9: #{tpu_custom_call.1} parent=1 // pred_fallthru
      _
    // Predicated region
    $region10: #{tpu_custom_call.1} parent=1 // pred_check
      _
    $region11: #{tpu_custom_call.1} parent=1 // pred_check_branch
      %36 = sbr.rel (0) target = $region13
    $region12: #{tpu_custom_call.1} parent=1 // pred_region
      %s38 = ssub.s32 16, 16
      %39 = vsyncadd [#allocation7], %s38
      %s41 = sshll.u32 [#allocation8], 4
      %s42 = int_to_ptr.vmem [resolvable:$true] %s41
      %44 = dma.hbm_to_vmem [thread:$0]  %s2, 16, %s42, [#allocation7]
    $region13: #{tpu_custom_call.1} parent=1 // pred_fallthru
      _
    // Predicated region
    $region14: #{tpu_custom_call.1} parent=1 // pred_check
      _
    $region15: #{tpu_custom_call.1} parent=1 // pred_check_branch
      %46 = sbr.rel (0) target = $region17
    $region16: #{tpu_custom_call.1} parent=1 // pred_region
      %47 = dma.done [#allocation4], 128
    $region17: #{tpu_custom_call.1} parent=1 // pred_fallthru
      _
    // Predicated region
    $region18: #{tpu_custom_call.1} parent=1 // pred_check
      _
    $region19: #{tpu_custom_call.1} parent=1 // pred_check_branch
      %49 = sbr.rel (0) target = $region21
    $region20: #{tpu_custom_call.1} parent=1 // pred_region
      %50 = dma.done [#allocation7], 256
    $region21: #{tpu_custom_call.1} parent=1 // pred_fallthru
      _
    // Predicated region
    $region22: #{tpu_custom_call.1} parent=1 // pred_check
      _
    $region23: #{tpu_custom_call.1} parent=1 // pred_check_branch
      %52 = sbr.rel (0) target = $region25
    $region24: #{tpu_custom_call.1} parent=1 // pred_region
      %53 = dma.done [#allocation7], 16
    $region25: #{tpu_custom_call.1} parent=1 // pred_fallthru
      _
    %p55 = scmp.eq.s32.totalorder 0, 0
    // Predicated region
    $region26: #{tpu_custom_call.1} parent=1 // pred_check
      %p56 = pneg %p55
    $region27: #{tpu_custom_call.1} parent=1 // pred_check_branch
      %58 = sbr.rel (%p56) target = $region29
    $region28: #{tpu_custom_call.1} parent=1 // pred_region
      %vm59 = vcmask 261120
      %60 = vst.msk [vmem:[#allocation2] sm:$0xff] %vm59, 0.0
      %61 = vst.msk [vmem:[#allocation2 + $0x8] sm:$0xff] %vm59, 0.0
    $region29: #{tpu_custom_call.1} parent=1 // pred_fallthru
      _
    %v62 = vld [vmem:[#allocation2] sm:$0xff]
    %v63 = vld [vmem:[#allocation2 + $0x8] sm:$0xff]
    %v64 = vld [vmem:[#allocation3] sm:$0xf]
    %v65 = vld [vmem:[#allocation3 + $0x4] sm:$0xf]
    %v66 = vld [vmem:[#allocation6] sm:$0xf]
    %v67 = vld [vmem:[#allocation6 + $0x4] sm:$0xf]
    %v68 = vld [vmem:[#allocation6 + $0x8] sm:$0xf]
    %v69 = vld [vmem:[#allocation6 + $0xc] sm:$0xf]
    %v72 = vunpack.c.l.b16 %v64
    %v73 = vunpack.c.l.b16 %v65
    %v74 = vpack.c.b16 %v73, %v72
    %v79 = vunpack.c.l.b16 %v66
    %v80 = vunpack.c.l.b16 %v67
    %v81 = vunpack.c.l.b16 %v68
    %v82 = vunpack.c.l.b16 %v69
    %v83 = vpack.c.b16 %v80, %v79
    %v84 = vpack.c.b16 %v82, %v81
    %vm87 = vcmask 261120
    %v89 = vsel %vm87, %v74, 0
    %91 = vmatprep.subr.bf16.mxu0 0
    %92 = vmatpush1.bf16.msra.mxu0 %v83
    %93 = vmatprep.subr.bf16.mxu0 0
    %94 = vmatpush1.bf16.msra.mxu0 %v84
    %95 = vmatprep.subr.bf16.mxu0 0
    %96 = vmatpush1.bf16.msra.mxu0 0
    %97 = vmatprep.subr.bf16.mxu0 0
    %98 = vmatpush1.bf16.msra.mxu0 0
    %99 = vmatprep.subr.bf16.mxu0 0
    %100 = vmatpush1.bf16.msra.mxu0 0
    %101 = vmatprep.subr.bf16.mxu0 0
    %102 = vmatpush1.bf16.msra.mxu0 0
    %103 = vmatprep.subr.bf16.mxu0 0
    %104 = vmatpush1.bf16.msra.mxu0 0
    %105 = vmatprep.subr.bf16.mxu0 0
    %106 = vmatpush1.bf16.msra.mxu0 0
    %107 = vmatprep.subr.bf16.mxu0 0
    %108 = vmatpush1.bf16.msra.mxu0 0
    %109 = vmatprep.subr.bf16.mxu0 0
    %110 = vmatpush1.bf16.msra.mxu0 0
    %111 = vmatprep.subr.bf16.mxu0 0
    %112 = vmatpush1.bf16.msra.mxu0 0
    %113 = vmatprep.subr.bf16.mxu0 0
    %114 = vmatpush1.bf16.msra.mxu0 0
    %115 = vmatprep.subr.bf16.mxu0 0
    %116 = vmatpush1.bf16.msra.mxu0 0
    %117 = vmatprep.subr.bf16.mxu0 0
    %118 = vmatpush1.bf16.msra.mxu0 0
    %119 = vmatprep.subr.bf16.mxu0 0
    %120 = vmatpush1.bf16.msra.mxu0 0
    %121 = vmatprep.subr.bf16.mxu0 0
    %122 = vmatpush1.bf16.msra.mxu0 0
    %123 = vmatprep.mubr.bf16.mxu0 0
    %124 = vmatmul.mubr.bf16.gmra.mrb[0].mxu0 %v89
    %v125 = vpop.f32.mrb[0].mxu0
    %v126 = vadd.f32 0.0, %v125
    %v127 = vpop.f32.mrb[0].mxu0
    %v128 = vpop.f32.mrb[0].mxu0
    %v129 = vadd.f32 0.0, %v128
    %v130 = vpop.f32.mrb[0].mxu0
    %131 = vdwg.mxu0
    %v132 = vadd.f32 %v62, %v126
    %v133 = vadd.f32 %v63, %v129
    %134 = vst.msk [vmem:[#allocation2] sm:$0xff] %vm87, %v132
    %135 = vst.msk [vmem:[#allocation2 + $0x8] sm:$0xff] %vm87, %v133
    // Predicated region
    $region30: #{tpu_custom_call.1} parent=1 // pred_check
      %p136 = pneg %p55
    $region31: #{tpu_custom_call.1} parent=1 // pred_check_branch
      %138 = sbr.rel (%p136) target = $region33
    $region32: #{tpu_custom_call.1} parent=1 // pred_region
      %v139 = vld [vmem:[#allocation2] sm:$0xff]
      %v140 = vld [vmem:[#allocation2 + $0x8] sm:$0xff]
      %v141 = vld [vmem:[#allocation8] sm:$0x1]
      %v143 = vlaneseq
      %v144 = vshrl.u32 %v143, 7
      %v145 = vsub.s32 0, %v144
      %v146 = vrot.slane %v141, %v145
      %v148 = vadd.f32 %v139, %v146
      %v149 = vadd.f32 %v140, %v146
      %v150 = vpack.c.bf16 %v149, %v148
      %v152 = vunpack.c.l.b16 %v150
      %v153 = vunpack.c.h.b16 %v150
      %v154 = vpack.c.b16 %v152, %v152
      %v155 = vpack.c.b16 %v153, %v153
      %vm158 = vcmask 257024
      %159 = vst.msk [vmem:[#allocation9] sm:$0xf] %vm158, %v154
      %160 = vst.msk [vmem:[#allocation9 + $0x4] sm:$0xf] %vm158, %v155
    $region33: #{tpu_custom_call.1} parent=1 // pred_fallthru
      _
    // Predicated region
    $region34: #{tpu_custom_call.1} parent=1 // pred_check
      _
    $region35: #{tpu_custom_call.1} parent=1 // pred_check_branch
      %162 = sbr.rel (0) target = $region37
    $region36: #{tpu_custom_call.1} parent=1 // pred_region
      %s164 = ssub.s32 128, 128
      %165 = vsyncadd [#allocation5], %s164
      %s166 = sshll.u32 [#allocation9], 4
      %s167 = int_to_ptr.vmem [resolvable:$true] %s166
      %172 = dma.vmem_to_hbm [thread:$0]  %s167, 128, %s3, [#allocation5], 64, 64, 4
    $region37: #{tpu_custom_call.1} parent=1 // pred_fallthru
      _
    // Predicated region
    $region38: #{tpu_custom_call.1} parent=1 // pred_check
      _
    $region39: #{tpu_custom_call.1} parent=1 // pred_check_branch
      %174 = sbr.rel (0) target = $region41
    $region40: #{tpu_custom_call.1} parent=1 // pred_region
      %175 = dma.done [#allocation5], 128
    $region41: #{tpu_custom_call.1} parent=1 // pred_fallthru
      _
    %176 = vsyncpa [#allocation4], 1
    %177 = vsyncpa [#allocation7], 1
    %178 = vsyncpa [#allocation5], 1

</llo_original>
